<compile_context>
chip_gen: v6e
topology: v6e:2x2x1
jax: 0.10.0
libtpu: 0.0.40
codegen_flags: <defaults>
</compile_context>

<pallas_src>
import functools

import jax
import jax.numpy as jnp
from jax.experimental import pallas as pl
from jax.experimental.pallas import tpu as pltpu


def _pooling_kernel(x_ref, o_ref, *, no_bg, from_logits):
    """x_ref: (C, T) logits tile; o_ref: (C_out, T) masks tile.

    C is on the sublane axis, the spatial tile T (multiple of 128) is on the
    lane axis, so softmax is a per-lane reduce across a handful of sublanes.
    """
    x = x_ref[...].astype(jnp.float32)
    if from_logits:
        m = jnp.max(x, axis=0, keepdims=True)        # (1, T) sublane reduce (XLU)
        e = jnp.exp(x - m)                           # EUP
        s = jnp.sum(e, axis=0, keepdims=True)        # (1, T) sublane reduce (XLU)
        inv = 1.0 / s                                # one divide per lane
        p = e * inv                                  # broadcast multiply (VPU)
    else:
        p = x
    if no_bg:
        p = p[1:, :]                                 # drop background channel
    o_ref[...] = p.astype(o_ref.dtype)


def pooling_feature_extractor(logits_masks, *, no_bg, from_logits=True,
                              max_tile_lanes=2048):
    """logits_masks: (N, C, H, W) -> (N, C - no_bg, H, W)."""
    N, C, H, W = logits_masks.shape
    HW = H * W
    C_out = C - 1 if no_bg else C

    # Lane-dense spatial slab: pad H*W up to a multiple of 128 (and of the tile).
    lane = 128
    hw_pad = pl.cdiv(HW, lane) * lane
    tile = hw_pad if hw_pad <= max_tile_lanes else max_tile_lanes
    hw_pad = pl.cdiv(hw_pad, tile) * tile

    x2 = logits_masks.reshape(N, C, HW)
    if hw_pad != HW:
        x2 = jnp.pad(x2, ((0, 0), (0, 0), (0, hw_pad - HW)))

    kernel = functools.partial(_pooling_kernel, no_bg=no_bg,
                               from_logits=from_logits)
    itemsize = jnp.dtype(logits_masks.dtype).itemsize
    cost = pl.CostEstimate(
        flops=4 * N * C * hw_pad,
        transcendentals=(N * C * hw_pad) if from_logits else 0,
        bytes_accessed=(N * C * hw_pad + N * C_out * hw_pad) * itemsize,
    )

    y = pl.pallas_call(
        kernel,
        out_shape=jax.ShapeDtypeStruct((N, C_out, hw_pad), logits_masks.dtype),
        grid_spec=pltpu.PrefetchScalarGridSpec(
            num_scalar_prefetch=0,
            grid=(N, hw_pad // tile),
            in_specs=[pl.BlockSpec((None, C, tile), lambda n, t: (n, 0, t))],
            out_specs=pl.BlockSpec((None, C_out, tile), lambda n, t: (n, 0, t)),
        ),
        compiler_params=pltpu.CompilerParams(
            dimension_semantics=("parallel", "parallel")),
        cost_estimate=cost,
    )(x2)

    # Strip the lane padding and restore NCHW spatial dims.
    return y[:, :, :HW].reshape(N, C_out, H, W)


def _reference(logits_masks, *, no_bg, from_logits=True):
    masks = jax.nn.softmax(logits_masks, axis=1) if from_logits else logits_masks
    return masks[:, 1:] if no_bg else masks


if __name__ == "__main__":
    # PoolingFeatureExtractor over part-segmentation logits (N, C, H, W).
    N, C, H, W = 2, 4, 16, 16
    key = jax.random.PRNGKey(0)
    x = jax.random.normal(key, (N, C, H, W), dtype=jnp.float32)

    # from_logits=True path (softmax), with and without background drop.
    for no_bg in (True, False):
        out = pooling_feature_extractor(x, no_bg=no_bg, from_logits=True)
        out = jax.block_until_ready(out)
        ref = _reference(x, no_bg=no_bg, from_logits=True)
        assert out.shape == ref.shape, (out.shape, ref.shape)
        assert jnp.allclose(out, ref, atol=1e-5, rtol=1e-5), f"mismatch no_bg={no_bg}"

    # from_logits=False pass-through path (identity + channel drop).
    out = pooling_feature_extractor(x, no_bg=True, from_logits=False)
    out = jax.block_until_ready(out)
    ref = _reference(x, no_bg=True, from_logits=False)
    assert jnp.allclose(out, ref, atol=1e-6, rtol=1e-6), "mismatch pass-through"

    print("KERNEL_OK")
</pallas_src>

<mosaic_0001>
module attributes {stable_mosaic.version = 11 : i64} {
  func.func @_pooling_kernel(%arg0: i32, %arg1: i32, %arg2: memref<1x4x256xf32, #tpu.memory_space<vmem>>, %arg3: memref<1x3x256xf32, #tpu.memory_space<vmem>>) attributes {dimension_semantics = [#tpu.dimension_semantics<parallel>, #tpu.dimension_semantics<parallel>], iteration_bounds = array<i64: 2, 1>, scalar_prefetch = 0 : i64, scratch_operands = 0 : i64, tpu.core_type = #tpu.core_type<tc>, window_params = [{transform_indices = @transform_0, window_bounds = array<i64: 1, 4, 256>}, {transform_indices = @transform_1, window_bounds = array<i64: 1, 3, 256>}]} {
    %c0 = arith.constant 0 : index
    %c0_0 = arith.constant 0 : index
    %c0_1 = arith.constant 0 : index
    %0 = vector.load %arg2[%c0, %c0_0, %c0_1] : memref<1x4x256xf32, #tpu.memory_space<vmem>>, vector<1x4x256xf32>
    %1 = vector.shape_cast %0 : vector<1x4x256xf32> to vector<4x256xf32>
    %cst = arith.constant dense<0xFF800000> : vector<256xf32>
    %2 = vector.multi_reduction <maximumf>, %1, %cst [0] : vector<4x256xf32> to vector<256xf32>
    %3 = vector.shape_cast %2 : vector<256xf32> to vector<1x256xf32>
    %4 = vector.broadcast %3 : vector<1x256xf32> to vector<4x256xf32>
    %5 = arith.subf %1, %4 : vector<4x256xf32>
    %6 = math.exp %5 : vector<4x256xf32>
    %cst_2 = arith.constant dense<0.000000e+00> : vector<256xf32>
    %7 = vector.multi_reduction <add>, %6, %cst_2 [0] : vector<4x256xf32> to vector<256xf32>
    %8 = vector.shape_cast %7 : vector<256xf32> to vector<1x256xf32>
    %cst_3 = arith.constant 1.000000e+00 : f32
    %9 = vector.broadcast %cst_3 : f32 to vector<1x256xf32>
    %10 = arith.divf %9, %8 : vector<1x256xf32>
    %11 = vector.broadcast %10 : vector<1x256xf32> to vector<4x256xf32>
    %12 = arith.mulf %6, %11 : vector<4x256xf32>
    %13 = vector.extract_strided_slice %12 {offsets = [1, 0], sizes = [3, 256], strides = [1, 1]} : vector<4x256xf32> to vector<3x256xf32>
    %c0_4 = arith.constant 0 : index
    %c0_5 = arith.constant 0 : index
    %c0_6 = arith.constant 0 : index
    %14 = vector.load %arg3[%c0_4, %c0_5, %c0_6] : memref<1x3x256xf32, #tpu.memory_space<vmem>>, vector<1x3x256xf32>
    %15 = vector.shape_cast %14 : vector<1x3x256xf32> to vector<3x256xf32>
    %16 = vector.shape_cast %13 : vector<3x256xf32> to vector<1x3x256xf32>
    tpu.vector_store %arg3[%c0_4, %c0_5, %c0_6], %16 {strides = array<i32>} : memref<1x3x256xf32, #tpu.memory_space<vmem>>, vector<1x3x256xf32>,
    return
  }
  func.func @transform_0(%arg0: i32, %arg1: i32) -> (i32, i32, i32) {
    %c0_i32 = arith.constant 0 : i32
    %c0_i32_0 = arith.constant 0 : i32
    return %arg0, %c0_i32, %arg1 : i32, i32, i32
  }
  func.func @transform_1(%arg0: i32, %arg1: i32) -> (i32, i32, i32) {
    %c0_i32 = arith.constant 0 : i32
    %c0_i32_0 = arith.constant 0 : i32
    return %arg0, %c0_i32, %arg1 : i32, i32, i32
  }
}

</mosaic_0001>

<llo_original>
// kernel: tpu_custom_call.1
$region0: #{tpu_custom_call.1}
  #allocation0 [shape = 'u32[]', space=smem, size = 0x4, offset = 0x4, fixed_abs, tag = 'smem constant byte address 0x4 - core index']
  #allocation1 [shape = 'u32[144,128]{1,0:T(1,128)}', space=vmem, size = 0x12000, scoped, tag = 'internal scratch']
  %s0 = inlined_call_operand.hbm [shape: f32[2,4,256], index: 0, kind: input, shape index: {}]
  %s1 = inlined_call_operand.vmem [shape: f32[2,3,256], index: 1, kind: output, shape index: {}]
  %s2 = sld [smem:[#allocation0]]
  $region41: #{tpu_custom_call.1} parent=0
    _
  %s4 = ssub.s32 1, %s2
  %s5 = scalar_select 0, %s4, %s2
  $region1: #{tpu_custom_call.1} parent=0
    #allocation2 [shape = 'u8[8192]{0}', space=vmem, size = 0x2000, scoped, tag = 'input window, operand 0']
    #allocation3 [shape = 's32[2]{0}', space=sflag, size = 0x8, scoped, tag = 'scoped memory for tpu_custom_call.1']
    %6 = vsyncpa [#allocation3], 0
    %s7 = scalar_lea.sflag [#allocation3], 1
    %8 = vsyncpa %s7, 0
    loop: start=0, step=1, limit=4
    $region2: #{tpu_custom_call.1} parent=1 // loop_pre_header
      _
    $region3: #{tpu_custom_call.1} parent=1 // loop_header
      %s10 = sphi 0, %s14
      %p11 = scmp.ge.s32.totalorder %s10, 4
      %s17 = sphi 0, %s29
      %s18 = sphi 0, %s25
      %s19 = sphi 0, %s17
      %s20 = sphi 0, %s18
      %s21 = sphi 0, %s19
      %s22 = sphi 0, %s20
      %s34 = sphi 0, %s36
      %s37 = sphi 0, %s34
      %s38 = sphi 0, %s37
      %s54 = sphi 0, %s38
      %s62 = sphi 0, %s64
      %s65 = sphi 0, %s62
      %s66 = sphi 0, %s65
      %s82 = sphi 0, %s66
    $region4: #{tpu_custom_call.1} parent=1 // loop_header_branch
      %13 = sbr.rel (%p11) target = $region8
    $region5: #{tpu_custom_call.1} parent=1 // loop_body
      %s15 = ssub.s32 %s10, 1
      %s16 = ssub.s32 %s10, 2
      %s23 = sadd.s32 1, %s18
      %p24 = scmp.ge.s32.totalorder %s23, 1
      %s25 = scalar_select %p24, 0, %s23
      %s26 = sadd.s32 1, %s17
      %s27 = scalar_select %p24, %s26, %s17
      %p28 = scmp.ge.s32.totalorder %s27, 2
      %s29 = scalar_select %p28, 0, %s27
      %s30 = ssub.s32 %s17, %s29
      %s31 = ssub.s32 %s18, %s25
      %s32 = sor.u32 %s30, %s31
      %p33 = scmp.eq.s32.totalorder %s32, 0
      %s35 = sadd.s32 %s34, 1
      %s36 = scalar_select %p33, %s34, %s35
      %p39 = pneg %p33
      %p40 = scmp.eq.s32.totalorder %s10, 1
      %p41 = por %p39, %p40
      %p42 = scmp.ne.s32.totalorder %s34, %s37
      %p43 = scmp.eq.s32.totalorder %s10, 0
      %p44 = por %p42, %p43
      %p45 = scmp.ne.s32.totalorder %s34, %s37
      %p46 = scmp.eq.s32.totalorder %s15, 1
      %p47 = por %p45, %p46
      %p48 = scmp.ne.s32.totalorder %s37, %s38
      %p49 = scmp.eq.s32.totalorder %s15, 0
      %p50 = por %p48, %p49
      %p51 = scmp.ne.s32.totalorder %s37, %s38
      %p52 = scmp.eq.s32.totalorder %s16, 1
      %p53 = por %p51, %p52
      %p55 = scmp.ne.s32.totalorder %s38, %s54
      %p56 = scmp.eq.s32.totalorder %s16, 0
      %p57 = por %p55, %p56
      %s58 = ssub.s32 %s17, %s29
      %s59 = ssub.s32 %s18, %s25
      %s60 = sor.u32 %s58, %s59
      %p61 = scmp.eq.s32.totalorder %s60, 0
      %s63 = sadd.s32 %s62, 1
      %s64 = scalar_select %p61, %s62, %s63
      %p67 = pneg %p61
      %p68 = scmp.eq.s32.totalorder %s10, 1
      %p69 = por %p67, %p68
      %p70 = scmp.ne.s32.totalorder %s62, %s65
      %p71 = scmp.eq.s32.totalorder %s10, 0
      %p72 = por %p70, %p71
      %p73 = scmp.ne.s32.totalorder %s62, %s65
      %p74 = scmp.eq.s32.totalorder %s15, 1
      %p75 = por %p73, %p74
      %p76 = scmp.ne.s32.totalorder %s65, %s66
      %p77 = scmp.eq.s32.totalorder %s15, 0
      %p78 = por %p76, %p77
      %p79 = scmp.ne.s32.totalorder %s65, %s66
      %p80 = scmp.eq.s32.totalorder %s16, 1
      %p81 = por %p79, %p80
      %p83 = scmp.ne.s32.totalorder %s66, %s82
      %p84 = scmp.eq.s32.totalorder %s16, 0
      %p85 = por %p83, %p84
      %p86 = scmp.le.s32.totalorder 1, %s10
      %p87 = scmp.lt.s32.totalorder %s10, 3
      %p88 = pnand %p86, %p87
      %p89 = pneg %p88
      // Predicated region
      $region9: #{tpu_custom_call.1} parent=5 // pred_check
        _
      $region10: #{tpu_custom_call.1} parent=5 // pred_check_branch
        %91 = sbr.rel (%p88) target = $region12
      $region11: #{tpu_custom_call.1} parent=5 // pred_region
        %s92 = ssub.s32 %s10, 1
      $region12: #{tpu_custom_call.1} parent=5 // pred_fallthru
        _
      %p93 = scmp.lt.s32.totalorder %s10, 2
      // Predicated region
      $region13: #{tpu_custom_call.1} parent=5 // pred_check
        %p94 = pneg %p93
      $region14: #{tpu_custom_call.1} parent=5 // pred_check_branch
        %96 = sbr.rel (%p94) target = $region16
      $region15: #{tpu_custom_call.1} parent=5 // pred_region
        // Predicated region
        $region17: #{tpu_custom_call.1} parent=15 // pred_check
          %p97 = pneg %p44
        $region18: #{tpu_custom_call.1} parent=15 // pred_check_branch
          %99 = sbr.rel (%p97) target = $region20
        $region19: #{tpu_custom_call.1} parent=15 // pred_region
          %s100 = sand.u32 %s34, 1
          %s101 = scalar_lea.sflag [#allocation3], %s100
          %s102 = sand.u32 %s34, 1
          %s103 = smul.addr %s102, 8
          %s104 = scalar_lea.vmem [#allocation2], %s103
          %s105 = smul.u32 2, %s18
          %s107 = ssub.s32 128, 128
          %108 = vsyncadd %s101, %s107
          %s109 = smul.addr %s17, 2
          %s110 = sadd.s32 %s105, %s109
          %s111 = smul.addr %s110, 64
          %s112 = scalar_lea.hbm %s0, %s111
          %s114 = sshll.u32 %s104, 4
          %s115 = int_to_ptr.vmem [resolvable:$true] %s114
          %117 = dma.hbm_to_vmem [thread:$0]  %s112, 128, %s115, %s101
        $region20: #{tpu_custom_call.1} parent=15 // pred_fallthru
          _
      $region16: #{tpu_custom_call.1} parent=5 // pred_fallthru
        _
      %p118 = scmp.le.s32.totalorder 1, %s10
      %p119 = scmp.lt.s32.totalorder %s10, 3
      %p120 = pnand %p118, %p119
      %p121 = pneg %p120
      // Predicated region
      $region21: #{tpu_custom_call.1} parent=5 // pred_check
        _
      $region22: #{tpu_custom_call.1} parent=5 // pred_check_branch
        %123 = sbr.rel (%p120) target = $region24
      $region23: #{tpu_custom_call.1} parent=5 // pred_region
        %s124 = ssub.s32 %s10, 1
        %s125 = sand.u32 %s37, 1
        %s126 = scalar_lea.sflag [#allocation3], %s125
        %s127 = sand.u32 %s37, 1
        %s128 = smul.addr %s127, 8
        %s129 = scalar_lea.vmem [#allocation2], %s128
        // Predicated region
        $region25: #{tpu_custom_call.1} parent=23 // pred_check
          %p130 = pneg %p50
        $region26: #{tpu_custom_call.1} parent=23 // pred_check_branch
          %132 = sbr.rel (%p130) target = $region28
        $region27: #{tpu_custom_call.1} parent=23 // pred_region
          %133 = dma.done %s126, 128
        $region28: #{tpu_custom_call.1} parent=23 // pred_fallthru
          _
        %s134 = sand.u32 %s37, 1
        %s135 = scalar_lea.sflag [#allocation3], %s134
        %s136 = sand.u32 %s37, 1
        %s137 = smul.addr %s136, 8
        %s138 = scalar_lea.vmem [#allocation2], %s137
        %p139 = pneg %p50
        %p140 = pneg %p47
        %p141 = pneg %p78
        %p142 = pneg %p75
        %s143 = smul.u32 2, %s20
        %p144 = scmp.lt.s32.totalorder %s19, 1
        %s145 = scalar_select %p144, %s19, 1
        %p146 = scmp.lt.s32.totalorder %s143, 1
        %s147 = scalar_select %p146, %s143, 1
        %s148 = smul.addr %s145, 2
        %s149 = sadd.s32 %s147, %s148
        %s150 = smul.addr %s149, 4
        %s151 = scalar_lea.vmem %s1, %s150
        %s152 = smul.u32 2, %s20
        %s153 = smul.u32 2, %s20
        %p154 = scmp.lt.s32.totalorder %s19, 1
        %s155 = scalar_select %p154, %s19, 1
        %p156 = scmp.lt.s32.totalorder %s153, 1
        %s157 = scalar_select %p156, %s153, 1
        %s158 = smul.addr %s155, 2
        %s159 = sadd.s32 %s157, %s158
        %s160 = smul.addr %s159, 4
        %s161 = scalar_lea.vmem %s1, %s160
        %s162 = smul.u32 2, %s20
        %v163 = vld [vmem:[%s129] sm:$0xff]
        %v165 = vcombine.high %v163, %v163
        %vm167 = vcmask 1043456
        %v168 = vsel %vm167, %v163, -inf
        %v169 = vrot.slane %v168, 4
        %v170 = vmax.f32 %v168, %v169
        %v171 = vrot.slane %v170, 2
        %v172 = vmax.f32 %v170, %v171
        %v173 = vrot.slane %v172, 1
        %v174 = vmax.f32 %v172, %v173
        %v175 = vsel %vm167, %v165, -inf
        %v176 = vrot.slane %v175, 4
        %v177 = vmax.f32 %v175, %v176
        %v178 = vrot.slane %v177, 2
        %v179 = vmax.f32 %v177, %v178
        %v180 = vrot.slane %v179, 1
        %v181 = vmax.f32 %v179, %v180
        %v184 = vcombine.low %v174, %v181
        %v186 = vsub.f32 %v163, %v184
        %v187 = vmul.f32 %v186, 1.442695
        %v188 = vpow.pop %v187
        %v190 = vcombine.high %v188, %v188
        %v192 = vsel %vm167, %v188, 0.0
        %v193 = vrot.slane %v192, 4
        %v194 = vadd.f32 %v192, %v193
        %v195 = vrot.slane %v194, 2
        %v196 = vadd.f32 %v194, %v195
        %v197 = vrot.slane %v196, 1
        %v198 = vadd.f32 %v196, %v197
        %v199 = vsel %vm167, %v190, 0.0
        %v200 = vrot.slane %v199, 4
        %v201 = vadd.f32 %v199, %v200
        %v202 = vrot.slane %v201, 2
        %v203 = vadd.f32 %v201, %v202
        %v204 = vrot.slane %v203, 1
        %v205 = vadd.f32 %v203, %v204
        %v206 = vrcp.pop %v198
        %v207 = vmul.f32 1.0, %v206
        %v208 = vrcp.pop %v205
        %v209 = vmul.f32 1.0, %v208
        %v212 = vcombine.low %v207, %v209
        %v214 = vmul.f32 %v188, %v212
        %v216 = vrot.slane %v214, 5
        %v217 = vrot.slane %v216, 4
        %219 = vst [vmem:[%s161] sm:$0x77] %v217
        %s220 = smul.u32 2, %s20
        %p221 = scmp.lt.s32.totalorder %s19, 1
        %s222 = scalar_select %p221, %s19, 1
        %p223 = scmp.lt.s32.totalorder %s220, 1
        %s224 = scalar_select %p223, %s220, 1
        %s225 = smul.addr %s222, 2
        %s226 = sadd.s32 %s224, %s225
        %s227 = smul.addr %s226, 4
        %s228 = scalar_lea.vmem %s1, %s227
        // Predicated region
        $region29: #{tpu_custom_call.1} parent=23 // pred_check
          %p229 = pneg %p75
        $region30: #{tpu_custom_call.1} parent=23 // pred_check_branch
          %231 = sbr.rel (%p229) target = $region32
        $region31: #{tpu_custom_call.1} parent=23 // pred_region
          %s232 = smul.u32 2, %s20
        $region32: #{tpu_custom_call.1} parent=23 // pred_fallthru
          _
      $region24: #{tpu_custom_call.1} parent=5 // pred_fallthru
        _
      %p233 = scmp.le.s32.totalorder 2, %s10
      // Predicated region
      $region33: #{tpu_custom_call.1} parent=5 // pred_check
        %p234 = pneg %p233
      $region34: #{tpu_custom_call.1} parent=5 // pred_check_branch
        %236 = sbr.rel (%p234) target = $region36
      $region35: #{tpu_custom_call.1} parent=5 // pred_region
        %s237 = ssub.s32 %s10, 2
        // Predicated region
        $region37: #{tpu_custom_call.1} parent=35 // pred_check
          %p238 = pneg %p81
        $region38: #{tpu_custom_call.1} parent=35 // pred_check_branch
          %240 = sbr.rel (%p238) target = $region40
        $region39: #{tpu_custom_call.1} parent=35 // pred_region
          %s241 = smul.u32 2, %s22
          %p242 = scmp.lt.s32.totalorder %s21, 1
          %s243 = scalar_select %p242, %s21, 1
          %p244 = scmp.lt.s32.totalorder %s241, 1
          %s245 = scalar_select %p244, %s241, 1
          %s246 = smul.addr %s243, 2
          %s247 = sadd.s32 %s245, %s246
          %s248 = smul.addr %s247, 4
          %s249 = scalar_lea.vmem %s1, %s248
        $region40: #{tpu_custom_call.1} parent=35 // pred_fallthru
          _
      $region36: #{tpu_custom_call.1} parent=5 // pred_fallthru
        _
    $region6: #{tpu_custom_call.1} parent=1 // loop_footer
      %s14 = sadd.s32 1, %s10
    $region7: #{tpu_custom_call.1} parent=1 // loop_footer_branch
      %9 = sbr.rel target = $region3
    $region8: #{tpu_custom_call.1} parent=1 // loop_exit
      _
    %250 = vsyncpa [#allocation3], 1
    %s251 = scalar_lea.sflag [#allocation3], 1
    %252 = vsyncpa %s251, 1

</llo_original>
